<compile_context>
chip_gen: v7x
topology: tpu7x:2x2x1
jax: 0.10.0
libtpu: 0.0.40
codegen_flags: <defaults>
</compile_context>

<pallas_src>
import math
import functools

import jax
import jax.numpy as jnp
from jax.experimental import pallas as pl
from jax.experimental.pallas import tpu as pltpu


def _round_up(n, m):
    return ((n + m - 1) // m) * m


def _cdiv(a, b):
    return (a + b - 1) // b


def _arc_margin_kernel(tile_flag_ref, x_ref, label_ref, w_ref, out_ref, *,
                       cos_m, sin_m, th, mm, scale, ls_eps, easy_margin,
                       n_classes, block_n):
    j = pl.program_id(0)

    # cosine for this class tile: (B, K) @ (K, block_n), f32 accumulation.
    # Both operands were normalized and cast in the wrapper.
    cosine = jnp.dot(x_ref[...], w_ref[...], preferred_element_type=jnp.float32)

    def fast_path():
        # No label falls in this class tile -> logits are just scale*cosine.
        out_ref[...] = (cosine * scale).astype(out_ref.dtype)

    def margin_path():
        # Clamp: f32 MXU accumulation can push |cosine| slightly past 1.
        sine = jnp.sqrt(jnp.maximum(1.0 - cosine * cosine, 0.0))
        phi = cosine * cos_m - sine * sin_m
        if easy_margin:
            phi = jnp.where(cosine > 0.0, phi, cosine)
        else:
            phi = jnp.where(cosine > th, phi, cosine - mm)

        # Vectorized one-hot: (B, block_n) column ids vs (B, 1) labels.
        col_ids = (jax.lax.broadcasted_iota(jnp.int32, cosine.shape, 1)
                   + j * block_n)
        hit = col_ids == label_ref[...]                  # broadcast (B,1)

        if ls_eps > 0.0:
            one_hot = jnp.where(hit, 1.0, 0.0)
            one_hot = (1.0 - ls_eps) * one_hot + ls_eps / n_classes
            out = one_hot * phi + (1.0 - one_hot) * cosine
        else:
            out = jnp.where(hit, phi, cosine)
        out_ref[...] = (out * scale).astype(out_ref.dtype)

    if ls_eps > 0.0:
        # Label smoothing touches every column; no tile may skip the fixup.
        margin_path()
    else:
        in_tile = tile_flag_ref[j] > 0                   # one SMEM read
        pl.when(in_tile)(margin_path)
        pl.when(jnp.logical_not(in_tile))(fast_path)


def arc_margin_product(x, label, weight, *, scale=30.0, margin=0.5,
                       easy_margin=False, ls_eps=0.0, block_n=None,
                       param_dtype=jnp.bfloat16, out_dtype=jnp.float32,
                       target_tile_bytes=4 << 20):
    """ArcMarginProduct.forward.

    x:      (B, in_features) float
    label:  (B,) int
    weight: (out_features, in_features) float   (PyTorch layout)
    returns (B, out_features) logits in `out_dtype` (f32 by default; pass
            bf16 to halve the output HBM stream at large batch).
    """
    x = x.astype(jnp.float32)
    weight = weight.astype(jnp.float32)
    B, K = x.shape
    N, K_w = weight.shape
    assert K == K_w, "weight/in_features mismatch"

    # --- batch-independent / per-call prep hoisted out of the kernel --------
    w_norm = jnp.sqrt(jnp.sum(weight * weight, axis=1, keepdims=True))
    w_n_t = (weight / jnp.maximum(w_norm, 1e-12)).T.astype(param_dtype)  # (K,N)

    x_norm = jnp.sqrt(jnp.sum(x * x, axis=1, keepdims=True))
    x_n = (x / jnp.maximum(x_norm, 1e-12)).astype(param_dtype)           # (B,K)

    itemsize = jnp.dtype(param_dtype).itemsize
    n_pad128 = _round_up(N, 128)
    if block_n is None:
        # Aim for ~target_tile_bytes per streamed weight tile, with near-equal
        # tiles and at least 2 grid steps (megacore) when N allows.
        bn_target = max(128, target_tile_bytes // max(K * itemsize, 1))
        n_tiles = max(1, _cdiv(n_pad128, bn_target))
        if n_pad128 >= 256:
            n_tiles = max(n_tiles, 2)
        block_n = _round_up(_cdiv(n_pad128, n_tiles), 128)
    assert block_n % 128 == 0, "block_n must be a multiple of 128"
    n_tiles = _cdiv(n_pad128, block_n)
    n_pad = n_tiles * block_n
    if n_pad != N:
        w_n_t = jnp.pad(w_n_t, ((0, 0), (0, n_pad - N)))

    label = label.astype(jnp.int32).reshape(B)
    label_col = label.reshape(B, 1)                       # VMEM operand
    # Per-tile "contains a label" bitmap (scalar-prefetched to SMEM).
    tile_flags = jnp.zeros((n_tiles,), jnp.int32).at[label // block_n].set(1)

    kernel = functools.partial(
        _arc_margin_kernel,
        cos_m=math.cos(margin), sin_m=math.sin(margin),
        th=math.cos(math.pi - margin),
        mm=math.sin(math.pi - margin) * margin,
        scale=float(scale), ls_eps=float(ls_eps),
        easy_margin=bool(easy_margin), n_classes=N, block_n=block_n)

    # VMEM budget: resident x_n + label, double-buffered weight + output tile.
    out_itemsize = jnp.dtype(out_dtype).itemsize
    vmem_need = (B * K * itemsize
                 + B * 4
                 + 2 * K * block_n * itemsize
                 + 2 * B * block_n * out_itemsize
                 + (1 << 20))
    try:
        phys_vmem = int(pltpu.get_tpu_info().vmem_capacity_bytes)
    except Exception:
        phys_vmem = 64 << 20                              # conservative (v7x)
    vmem_cap = min(phys_vmem * 3 // 4, 100 << 20)
    vmem_limit = int(min(max(2 * vmem_need, 16 << 20), vmem_cap))

    out = pl.pallas_call(
        kernel,
        out_shape=jax.ShapeDtypeStruct((B, n_pad), out_dtype),
        grid_spec=pltpu.PrefetchScalarGridSpec(
            num_scalar_prefetch=1,                        # tile bitmap -> SMEM
            grid=(n_tiles,),
            in_specs=[
                pl.BlockSpec((B, K), lambda j, flags: (0, 0)),        # x_n resident
                pl.BlockSpec((B, 1), lambda j, flags: (0, 0)),        # labels
                pl.BlockSpec((K, block_n), lambda j, flags: (0, j)),  # W streamed
            ],
            out_specs=pl.BlockSpec((B, block_n), lambda j, flags: (0, j)),
        ),
        compiler_params=pltpu.CompilerParams(
            dimension_semantics=("parallel",),
            vmem_limit_bytes=vmem_limit),
    )(tile_flags, x_n, label_col, w_n_t)

    return out[:, :N]


def _reference(x, label, weight, *, scale, margin, easy_margin, ls_eps,
               param_dtype):
    """Pure-JAX ArcMarginProduct with the same bf16 operand quantization."""
    cos_m, sin_m = math.cos(margin), math.sin(margin)
    th = math.cos(math.pi - margin)
    mm = math.sin(math.pi - margin) * margin
    x_n = x / jnp.maximum(jnp.linalg.norm(x, axis=1, keepdims=True), 1e-12)
    w_n = weight / jnp.maximum(
        jnp.linalg.norm(weight, axis=1, keepdims=True), 1e-12)
    cosine = jnp.dot(x_n.astype(param_dtype), w_n.T.astype(param_dtype),
                     preferred_element_type=jnp.float32)
    sine = jnp.sqrt(jnp.maximum(1.0 - cosine * cosine, 0.0))
    phi = cosine * cos_m - sine * sin_m
    if easy_margin:
        phi = jnp.where(cosine > 0.0, phi, cosine)
    else:
        phi = jnp.where(cosine > th, phi, cosine - mm)
    one_hot = jax.nn.one_hot(label, weight.shape[0], dtype=jnp.float32)
    if ls_eps > 0:
        one_hot = (1.0 - ls_eps) * one_hot + ls_eps / weight.shape[0]
    return (one_hot * phi + (1.0 - one_hot) * cosine) * scale


if __name__ == "__main__":
    key = jax.random.PRNGKey(0)
    # Small analog of the real head: in_features=512, n_classes=8811, batch=8.
    B, K, N = 4, 128, 300          # N not a multiple of 128 -> exercises padding
    k_x, k_w, k_l = jax.random.split(key, 3)

    x = jax.random.normal(k_x, (B, K), jnp.float32)
    a = math.sqrt(6.0 / (N + K))   # xavier_uniform_ on (out_features, in_features)
    weight = jax.random.uniform(k_w, (N, K), jnp.float32, minval=-a, maxval=a)
    label = jax.random.randint(k_l, (B,), 0, N, dtype=jnp.int32)

    # Case 1: ls_eps=0, explicit block_n=128 -> 3-step grid, exercises the
    # per-tile skip path and padded lane columns.
    logits = arc_margin_product(x, label, weight, scale=30.0, margin=0.5,
                                block_n=128)
    jax.block_until_ready(logits)
    assert logits.shape == (B, N) and logits.dtype == jnp.float32
    ref = _reference(x, label, weight, scale=30.0, margin=0.5,
                     easy_margin=False, ls_eps=0.0, param_dtype=jnp.bfloat16)
    err1 = float(jnp.max(jnp.abs(logits - ref)))
    assert err1 < 2e-2, f"mismatch (ls_eps=0): max abs err {err1}"

    # Case 2: label smoothing + auto tile sizing (every tile takes margin path).
    logits2 = arc_margin_product(x, label, weight, scale=30.0, margin=0.5,
                                 ls_eps=0.1)
    jax.block_until_ready(logits2)
    assert logits2.shape == (B, N)
    ref2 = _reference(x, label, weight, scale=30.0, margin=0.5,
                      easy_margin=False, ls_eps=0.1, param_dtype=jnp.bfloat16)
    err2 = float(jnp.max(jnp.abs(logits2 - ref2)))
    assert err2 < 2e-2, f"mismatch (ls_eps=0.1): max abs err {err2}"

    print("KERNEL_OK")
</pallas_src>

<mosaic_0001>
module attributes {stable_mosaic.version = 11 : i64} {
  func.func @_arc_margin_kernel(%arg0: i32, %arg1: memref<3xi32, #tpu.memory_space<smem>>, %arg2: memref<4x128xbf16, #tpu.memory_space<vmem>>, %arg3: memref<4x1xi32, #tpu.memory_space<vmem>>, %arg4: memref<128x128xbf16, #tpu.memory_space<vmem>>, %arg5: memref<4x128xf32, #tpu.memory_space<vmem>>) attributes {dimension_semantics = [#tpu.dimension_semantics<parallel>], iteration_bounds = array<i64: 3>, scalar_prefetch = 1 : i64, scratch_operands = 0 : i64, tpu.core_type = #tpu.core_type<tc>, window_params = [{pipeline_mode = #tpu.pipeline_mode<synchronous>, transform_indices = @transform_0, window_bounds = array<i64: 4, 128>}, {pipeline_mode = #tpu.pipeline_mode<synchronous>, transform_indices = @transform_1, window_bounds = array<i64: 4, 1>}, {transform_indices = @transform_2, window_bounds = array<i64: 128, 128>}, {transform_indices = @transform_3, window_bounds = array<i64: 4, 128>}]} {
    %c0 = arith.constant 0 : index
    %c0_0 = arith.constant 0 : index
    %0 = vector.load %arg2[%c0, %c0_0] : memref<4x128xbf16, #tpu.memory_space<vmem>>, vector<4x128xbf16>
    %c0_1 = arith.constant 0 : index
    %c0_2 = arith.constant 0 : index
    %1 = vector.load %arg4[%c0_1, %c0_2] : memref<128x128xbf16, #tpu.memory_space<vmem>>, vector<128x128xbf16>
    %cst = arith.constant dense<0.000000e+00> : vector<4x128xf32>
    %2 = tpu.matmul %0, %1, %cst {dimension_numbers = #tpu.dot_dimension_numbers<[1], [0], [0], [1], [0, 0, 1, 1], [], []>} : vector<4x128xbf16>, vector<128x128xbf16>, vector<4x128xf32> -> vector<4x128xf32>
    %3 = arith.index_cast %arg0 : i32 to index
    %4 = memref.load %arg1[%3] : memref<3xi32, #tpu.memory_space<smem>>
    %c0_i32 = arith.constant 0 : i32
    %5 = arith.cmpi sgt, %4, %c0_i32 : i32
    %6 = arith.extui %5 : i1 to i32
    %c0_i32_3 = arith.constant 0 : i32
    %7 = arith.cmpi ne, %6, %c0_i32_3 : i32
    scf.if %7 {
      %11 = arith.mulf %2, %2 : vector<4x128xf32>
      %cst_5 = arith.constant 1.000000e+00 : f32
      %12 = vector.broadcast %cst_5 : f32 to vector<4x128xf32>
      %13 = arith.subf %12, %11 : vector<4x128xf32>
      %cst_6 = arith.constant 0.000000e+00 : f32
      %14 = vector.broadcast %cst_6 : f32 to vector<4x128xf32>
      %15 = arith.maximumf %13, %14 : vector<4x128xf32>
      %16 = math.sqrt %15 : vector<4x128xf32>
      %cst_7 = arith.constant 0.87758255 : f32
      %17 = vector.broadcast %cst_7 : f32 to vector<4x128xf32>
      %18 = arith.mulf %2, %17 : vector<4x128xf32>
      %cst_8 = arith.constant 0.47942555 : f32
      %19 = vector.broadcast %cst_8 : f32 to vector<4x128xf32>
      %20 = arith.mulf %16, %19 : vector<4x128xf32>
      %21 = arith.subf %18, %20 : vector<4x128xf32>
      %cst_9 = arith.constant -0.87758255 : f32
      %22 = vector.broadcast %cst_9 : f32 to vector<4x128xf32>
      %23 = arith.cmpf ogt, %2, %22 : vector<4x128xf32>
      %cst_10 = arith.constant 0.239712775 : f32
      %24 = vector.broadcast %cst_10 : f32 to vector<4x128xf32>
      %25 = arith.subf %2, %24 : vector<4x128xf32>
      %26 = arith.select %23, %21, %25 : vector<4x128xi1>, vector<4x128xf32>
      %27 = tpu.iota {dimensions = array<i32: 1>} : vector<4x128xi32>
      %c128_i32 = arith.constant 128 : i32
      %28 = arith.muli %arg0, %c128_i32 : i32
      %29 = vector.broadcast %28 : i32 to vector<4x128xi32>
      %30 = arith.addi %27, %29 : vector<4x128xi32>
      %c0_11 = arith.constant 0 : index
      %c0_12 = arith.constant 0 : index
      %31 = vector.load %arg3[%c0_11, %c0_12] : memref<4x1xi32, #tpu.memory_space<vmem>>, vector<4x1xi32>
      %32 = vector.broadcast %31 : vector<4x1xi32> to vector<4x128xi32>
      %33 = arith.cmpi eq, %30, %32 : vector<4x128xi32>
      %34 = arith.select %33, %26, %2 : vector<4x128xi1>, vector<4x128xf32>
      %cst_13 = arith.constant 3.000000e+01 : f32
      %35 = vector.broadcast %cst_13 : f32 to vector<4x128xf32>
      %36 = arith.mulf %34, %35 : vector<4x128xf32>
      %c0_14 = arith.constant 0 : index
      %c0_15 = arith.constant 0 : index
      %37 = vector.load %arg5[%c0_14, %c0_15] : memref<4x128xf32, #tpu.memory_space<vmem>>, vector<4x128xf32>
      tpu.vector_store %arg5[%c0_14, %c0_15], %36 {strides = array<i32>} : memref<4x128xf32, #tpu.memory_space<vmem>>, vector<4x128xf32>,
    } else {
    }
    %true = arith.constant true
    %8 = arith.xori %5, %true : i1
    %9 = arith.extui %8 : i1 to i32
    %c0_i32_4 = arith.constant 0 : i32
    %10 = arith.cmpi ne, %9, %c0_i32_4 : i32
    scf.if %10 {
      %cst_5 = arith.constant 3.000000e+01 : f32
      %11 = vector.broadcast %cst_5 : f32 to vector<4x128xf32>
      %12 = arith.mulf %2, %11 : vector<4x128xf32>
      %c0_6 = arith.constant 0 : index
      %c0_7 = arith.constant 0 : index
      %13 = vector.load %arg5[%c0_6, %c0_7] : memref<4x128xf32, #tpu.memory_space<vmem>>, vector<4x128xf32>
      tpu.vector_store %arg5[%c0_6, %c0_7], %12 {strides = array<i32>} : memref<4x128xf32, #tpu.memory_space<vmem>>, vector<4x128xf32>,
    } else {
    }
    return
  }
  func.func @transform_0(%arg0: i32, %arg1: memref<3xi32, #tpu.memory_space<smem>>) -> (i32, i32) {
    %c0_i32 = arith.constant 0 : i32
    %c0_i32_0 = arith.constant 0 : i32
    %c0_i32_1 = arith.constant 0 : i32
    return %c0_i32, %c0_i32_0 : i32, i32
  }
  func.func @transform_1(%arg0: i32, %arg1: memref<3xi32, #tpu.memory_space<smem>>) -> (i32, i32) {
    %c0_i32 = arith.constant 0 : i32
    %c0_i32_0 = arith.constant 0 : i32
    %c0_i32_1 = arith.constant 0 : i32
    return %c0_i32, %c0_i32_0 : i32, i32
  }
  func.func @transform_2(%arg0: i32, %arg1: memref<3xi32, #tpu.memory_space<smem>>) -> (i32, i32) {
    %c0_i32 = arith.constant 0 : i32
    %c0_i32_0 = arith.constant 0 : i32
    return %c0_i32, %arg0 : i32, i32
  }
  func.func @transform_3(%arg0: i32, %arg1: memref<3xi32, #tpu.memory_space<smem>>) -> (i32, i32) {
    %c0_i32 = arith.constant 0 : i32
    %c0_i32_0 = arith.constant 0 : i32
    return %c0_i32, %arg0 : i32, i32
  }
}

</mosaic_0001>

<llo_original>
// kernel: tpu_custom_call.1
$region0: #{tpu_custom_call.1}
  #allocation0 [shape = 'u32[]', space=smem, size = 0x4, offset = 0x4, fixed_abs, tag = 'smem constant byte address 0x4 - core index']
  #allocation1 [shape = 'u32[144,128]{1,0:T(1,128)}', space=vmem, size = 0x12000, scoped, tag = 'internal scratch']
  #allocation2 [shape = 's32[1]{0}', space=sflag, size = 0x4, scoped, tag = 'scoped memory for tpu_custom_call.1']
  #allocation3 [shape = 'u8[512]{0}', space=smem, size = 0x200, scoped, tag = 'prefetched SMEM operand 0']
  %s0 = inlined_call_operand.vmem [shape: s32[3], index: 0, kind: input, shape index: {}]
  %s1 = inlined_call_operand.vmem [shape: bf16[4,128], index: 1, kind: input, shape index: {}]
  %s2 = inlined_call_operand.vmem [shape: s32[4,1], index: 2, kind: input, shape index: {}]
  %s3 = inlined_call_operand.hbm [shape: bf16[128,384], index: 3, kind: input, shape index: {}]
  %s4 = inlined_call_operand.hbm [shape: f32[4,384], index: 4, kind: output, shape index: {}]
  %s5 = sld [smem:[#allocation0]]
  $region57: #{tpu_custom_call.1} parent=0
    _
  %s7 = ssub.s32 1, %s5
  %s8 = scalar_select 0, %s7, %s5
  %s9 = sshll.u32 %s0, 4
  %s10 = int_to_ptr.vmem [resolvable:$true] %s9
  %12 = dma.vmem_to_smem %s10, 16, [#allocation3], [#allocation2]
  %13 = dma.done [#allocation2], 16
  %14 = sfence
  $region1: #{tpu_custom_call.1} parent=0
    #allocation4 [shape = 'u8[65536]{0}', space=vmem, size = 0x10000, scoped, tag = 'input window, operand 3']
    #allocation5 [shape = 's32[2]{0}', space=sflag, size = 0x8, scoped, tag = 'scoped memory for tpu_custom_call.1']
    #allocation6 [shape = 's32[2]{0}', space=sflag, size = 0x8, scoped, tag = 'scoped memory for tpu_custom_call.1']
    #allocation7 [shape = 'u8[4096]{0}', space=vmem, size = 0x1000, scoped, tag = 'output window, operand 0']
    %15 = vsyncpa [#allocation5], 0
    %s16 = scalar_lea.sflag [#allocation5], 1
    %17 = vsyncpa %s16, 0
    %18 = vsyncpa [#allocation6], 0
    %s19 = scalar_lea.sflag [#allocation6], 1
    %20 = vsyncpa %s19, 0
    loop: start=0, step=1, limit=5
    $region2: #{tpu_custom_call.1} parent=1 // loop_pre_header
      _
    $region3: #{tpu_custom_call.1} parent=1 // loop_header
      %s22 = sphi 0, %s26
      %p23 = scmp.ge.s32.totalorder %s22, 5
      %s30 = sphi 0, %s30
      %s32 = sphi 0, %s30
      %s33 = sphi 0, %s32
      %s47 = sphi 0, %s33
      %s51 = sphi 0, %s51
      %s53 = sphi 0, %s51
      %s54 = sphi 0, %s53
      %s68 = sphi 0, %s54
      %s74 = sphi 0, %s76
      %s77 = sphi 0, %s74
      %s78 = sphi 0, %s77
      %s94 = sphi 0, %s78
      %s100 = sphi 0, %s102
      %s103 = sphi 0, %s100
      %s104 = sphi 0, %s103
      %s120 = sphi 0, %s104
    $region4: #{tpu_custom_call.1} parent=1 // loop_header_branch
      %25 = sbr.rel (%p23) target = $region8
    $region5: #{tpu_custom_call.1} parent=1 // loop_body
      %s27 = ssub.s32 %s22, 1
      %s28 = ssub.s32 %s22, 2
      %s29 = sadd.s32 %s22, 1
      %s31 = sadd.s32 %s30, 1
      %p34 = scmp.eq.s32.totalorder %s22, 2
      %p35 = scmp.ne.s32.totalorder %s30, %s32
      %p36 = scmp.eq.s32.totalorder %s22, 0
      %p37 = por %p35, %p36
      %p38 = scmp.ne.s32.totalorder %s30, %s32
      %p39 = scmp.eq.s32.totalorder %s27, 2
      %p40 = por %p38, %p39
      %p41 = scmp.ne.s32.totalorder %s32, %s33
      %p42 = scmp.eq.s32.totalorder %s27, 0
      %p43 = por %p41, %p42
      %p44 = scmp.ne.s32.totalorder %s32, %s33
      %p45 = scmp.eq.s32.totalorder %s28, 2
      %p46 = por %p44, %p45
      %p48 = scmp.ne.s32.totalorder %s33, %s47
      %p49 = scmp.eq.s32.totalorder %s28, 0
      %p50 = por %p48, %p49
      %s52 = sadd.s32 %s51, 1
      %p55 = scmp.eq.s32.totalorder %s22, 2
      %p56 = scmp.ne.s32.totalorder %s51, %s53
      %p57 = scmp.eq.s32.totalorder %s22, 0
      %p58 = por %p56, %p57
      %p59 = scmp.ne.s32.totalorder %s51, %s53
      %p60 = scmp.eq.s32.totalorder %s27, 2
      %p61 = por %p59, %p60
      %p62 = scmp.ne.s32.totalorder %s53, %s54
      %p63 = scmp.eq.s32.totalorder %s27, 0
      %p64 = por %p62, %p63
      %p65 = scmp.ne.s32.totalorder %s53, %s54
      %p66 = scmp.eq.s32.totalorder %s28, 2
      %p67 = por %p65, %p66
      %p69 = scmp.ne.s32.totalorder %s54, %s68
      %p70 = scmp.eq.s32.totalorder %s28, 0
      %p71 = por %p69, %p70
      %s72 = ssub.s32 %s22, %s29
      %p73 = scmp.eq.s32.totalorder %s72, 0
      %s75 = sadd.s32 %s74, 1
      %s76 = scalar_select %p73, %s74, %s75
      %p79 = pneg %p73
      %p80 = scmp.eq.s32.totalorder %s22, 2
      %p81 = por %p79, %p80
      %p82 = scmp.ne.s32.totalorder %s74, %s77
      %p83 = scmp.eq.s32.totalorder %s22, 0
      %p84 = por %p82, %p83
      %p85 = scmp.ne.s32.totalorder %s74, %s77
      %p86 = scmp.eq.s32.totalorder %s27, 2
      %p87 = por %p85, %p86
      %p88 = scmp.ne.s32.totalorder %s77, %s78
      %p89 = scmp.eq.s32.totalorder %s27, 0
      %p90 = por %p88, %p89
      %p91 = scmp.ne.s32.totalorder %s77, %s78
      %p92 = scmp.eq.s32.totalorder %s28, 2
      %p93 = por %p91, %p92
      %p95 = scmp.ne.s32.totalorder %s78, %s94
      %p96 = scmp.eq.s32.totalorder %s28, 0
      %p97 = por %p95, %p96
      %s98 = ssub.s32 %s22, %s29
      %p99 = scmp.eq.s32.totalorder %s98, 0
      %s101 = sadd.s32 %s100, 1
      %s102 = scalar_select %p99, %s100, %s101
      %p105 = pneg %p99
      %p106 = scmp.eq.s32.totalorder %s22, 2
      %p107 = por %p105, %p106
      %p108 = scmp.ne.s32.totalorder %s100, %s103
      %p109 = scmp.eq.s32.totalorder %s22, 0
      %p110 = por %p108, %p109
      %p111 = scmp.ne.s32.totalorder %s100, %s103
      %p112 = scmp.eq.s32.totalorder %s27, 2
      %p113 = por %p111, %p112
      %p114 = scmp.ne.s32.totalorder %s103, %s104
      %p115 = scmp.eq.s32.totalorder %s27, 0
      %p116 = por %p114, %p115
      %p117 = scmp.ne.s32.totalorder %s103, %s104
      %p118 = scmp.eq.s32.totalorder %s28, 2
      %p119 = por %p117, %p118
      %p121 = scmp.ne.s32.totalorder %s104, %s120
      %p122 = scmp.eq.s32.totalorder %s28, 0
      %p123 = por %p121, %p122
      %p124 = scmp.le.s32.totalorder 1, %s22
      %p125 = scmp.lt.s32.totalorder %s22, 4
      %p126 = pnand %p124, %p125
      %p127 = pneg %p126
      // Predicated region
      $region9: #{tpu_custom_call.1} parent=5 // pred_check
        _
      $region10: #{tpu_custom_call.1} parent=5 // pred_check_branch
        %129 = sbr.rel (%p126) target = $region12
      $region11: #{tpu_custom_call.1} parent=5 // pred_region
        %s130 = ssub.s32 %s22, 1
        // Predicated region
        $region13: #{tpu_custom_call.1} parent=11 // pred_check
          %p131 = pneg %p43
        $region14: #{tpu_custom_call.1} parent=11 // pred_check_branch
          %133 = sbr.rel (%p131) target = $region16
        $region15: #{tpu_custom_call.1} parent=11 // pred_region
          _
        $region16: #{tpu_custom_call.1} parent=11 // pred_fallthru
          _
        // Predicated region
        $region17: #{tpu_custom_call.1} parent=11 // pred_check
          %p134 = pneg %p64
        $region18: #{tpu_custom_call.1} parent=11 // pred_check_branch
          %136 = sbr.rel (%p134) target = $region20
        $region19: #{tpu_custom_call.1} parent=11 // pred_region
          _
        $region20: #{tpu_custom_call.1} parent=11 // pred_fallthru
          _
      $region12: #{tpu_custom_call.1} parent=5 // pred_fallthru
        _
      %p137 = scmp.lt.s32.totalorder %s22, 3
      // Predicated region
      $region21: #{tpu_custom_call.1} parent=5 // pred_check
        %p138 = pneg %p137
      $region22: #{tpu_custom_call.1} parent=5 // pred_check_branch
        %140 = sbr.rel (%p138) target = $region24
      $region23: #{tpu_custom_call.1} parent=5 // pred_region
        // Predicated region
        $region25: #{tpu_custom_call.1} parent=23 // pred_check
          %p141 = pneg %p84
        $region26: #{tpu_custom_call.1} parent=23 // pred_check_branch
          %143 = sbr.rel (%p141) target = $region28
        $region27: #{tpu_custom_call.1} parent=23 // pred_region
          %s144 = sand.u32 %s74, 1
          %s145 = scalar_lea.sflag [#allocation5], %s144
          %s146 = sand.u32 %s74, 1
          %s147 = smul.addr %s146, 64
          %s148 = scalar_lea.vmem [#allocation4], %s147
          %s150 = ssub.s32 1024, 1024
          %151 = vsyncadd %s145, %s150
          %s152 = smul.addr %s22, 64
          %s153 = scalar_lea.hbm %s3, %s152
          %s154 = sshll.u32 %s148, 4
          %s155 = int_to_ptr.vmem [resolvable:$true] %s154
          %160 = dma.hbm_to_vmem [thread:$0]  %s153, 1024, %s155, %s145, 192, 64, 4
        $region28: #{tpu_custom_call.1} parent=23 // pred_fallthru
          _
      $region24: #{tpu_custom_call.1} parent=5 // pred_fallthru
        _
      %p161 = scmp.le.s32.totalorder 1, %s22
      %p162 = scmp.lt.s32.totalorder %s22, 4
      %p163 = pnand %p161, %p162
      %p164 = pneg %p163
      // Predicated region
      $region29: #{tpu_custom_call.1} parent=5 // pred_check
        _
      $region30: #{tpu_custom_call.1} parent=5 // pred_check_branch
        %166 = sbr.rel (%p163) target = $region32
      $region31: #{tpu_custom_call.1} parent=5 // pred_region
        %s167 = ssub.s32 %s22, 1
        %s168 = sand.u32 %s77, 1
        %s169 = scalar_lea.sflag [#allocation5], %s168
        %s170 = sand.u32 %s77, 1
        %s171 = smul.addr %s170, 64
        %s172 = scalar_lea.vmem [#allocation4], %s171
        // Predicated region
        $region33: #{tpu_custom_call.1} parent=31 // pred_check
          %p173 = pneg %p90
        $region34: #{tpu_custom_call.1} parent=31 // pred_check_branch
          %175 = sbr.rel (%p173) target = $region36
        $region35: #{tpu_custom_call.1} parent=31 // pred_region
          %176 = dma.done %s169, 1024
        $region36: #{tpu_custom_call.1} parent=31 // pred_fallthru
          _
        %p177 = pneg %p43
        %p178 = pneg %p40
        %p179 = pneg %p64
        %p180 = pneg %p61
        %s181 = sand.u32 %s77, 1
        %s182 = scalar_lea.sflag [#allocation5], %s181
        %s183 = sand.u32 %s77, 1
        %s184 = smul.addr %s183, 64
        %s185 = scalar_lea.vmem [#allocation4], %s184
        %p186 = pneg %p90
        %p187 = pneg %p87
        %p188 = pneg %p116
        %p189 = pneg %p113
        %s190 = sand.u32 %s103, 1
        %s191 = scalar_lea.sflag [#allocation6], %s190
        %s192 = sand.u32 %s103, 1
        %s193 = smul.addr %s192, 4
        %s194 = scalar_lea.vmem [#allocation7], %s193
        %v196 = vld [vmem:[%s1] sm:$0x3]
        %v197 = vld [vmem:[%s172] sm:$0xf]
        %v198 = vld [vmem:[%s172 + $0x4] sm:$0xf]
        %v199 = vld [vmem:[%s172 + $0x8] sm:$0xf]
        %v200 = vld [vmem:[%s172 + $0xc] sm:$0xf]
        %v201 = vld [vmem:[%s172 + $0x10] sm:$0xf]
        %v202 = vld [vmem:[%s172 + $0x14] sm:$0xf]
        %v203 = vld [vmem:[%s172 + $0x18] sm:$0xf]
        %v204 = vld [vmem:[%s172 + $0x1c] sm:$0xf]
        %v205 = vld [vmem:[%s172 + $0x20] sm:$0xf]
        %v206 = vld [vmem:[%s172 + $0x24] sm:$0xf]
        %v207 = vld [vmem:[%s172 + $0x28] sm:$0xf]
        %v208 = vld [vmem:[%s172 + $0x2c] sm:$0xf]
        %v209 = vld [vmem:[%s172 + $0x30] sm:$0xf]
        %v210 = vld [vmem:[%s172 + $0x34] sm:$0xf]
        %v211 = vld [vmem:[%s172 + $0x38] sm:$0xf]
        %v212 = vld [vmem:[%s172 + $0x3c] sm:$0xf]
        %v229 = vunpack.c.l.b16 %v197
        %v230 = vunpack.c.l.b16 %v198
        %v231 = vunpack.c.l.b16 %v199
        %v232 = vunpack.c.l.b16 %v200
        %v233 = vunpack.c.l.b16 %v201
        %v234 = vunpack.c.l.b16 %v202
        %v235 = vunpack.c.l.b16 %v203
        %v236 = vunpack.c.l.b16 %v204
        %v237 = vunpack.c.l.b16 %v205
        %v238 = vunpack.c.l.b16 %v206
        %v239 = vunpack.c.l.b16 %v207
        %v240 = vunpack.c.l.b16 %v208
        %v241 = vunpack.c.l.b16 %v209
        %v242 = vunpack.c.l.b16 %v210
        %v243 = vunpack.c.l.b16 %v211
        %v244 = vunpack.c.l.b16 %v212
        %v245 = vpack.c.b16 %v230, %v229
        %v246 = vpack.c.b16 %v232, %v231
        %v247 = vpack.c.b16 %v234, %v233
        %v248 = vpack.c.b16 %v236, %v235
        %v249 = vpack.c.b16 %v238, %v237
        %v250 = vpack.c.b16 %v240, %v239
        %v251 = vpack.c.b16 %v242, %v241
        %v252 = vpack.c.b16 %v244, %v243
        %261 = vmatprep.subr.bf16.mxu0 0
        %262 = vmatpush1.bf16.msra.mxu0 %v245
        %263 = vmatprep.subr.bf16.mxu0 0
        %264 = vmatpush1.bf16.msra.mxu0 %v246
        %265 = vmatprep.subr.bf16.mxu0 0
        %266 = vmatpush1.bf16.msra.mxu0 %v247
        %267 = vmatprep.subr.bf16.mxu0 0
        %268 = vmatpush1.bf16.msra.mxu0 %v248
        %269 = vmatprep.subr.bf16.mxu0 0
        %270 = vmatpush1.bf16.msra.mxu0 %v249
        %271 = vmatprep.subr.bf16.mxu0 0
        %272 = vmatpush1.bf16.msra.mxu0 %v250
        %273 = vmatprep.subr.bf16.mxu0 0
        %274 = vmatpush1.bf16.msra.mxu0 %v251
        %275 = vmatprep.subr.bf16.mxu0 0
        %276 = vmatpush1.bf16.msra.mxu0 %v252
        %277 = vmatprep.subr.bf16.mxu0 0
        %278 = vmatpush1.bf16.msra.mxu0 0
        %279 = vmatprep.subr.bf16.mxu0 0
        %280 = vmatpush1.bf16.msra.mxu0 0
        %281 = vmatprep.subr.bf16.mxu0 0
        %282 = vmatpush1.bf16.msra.mxu0 0
        %283 = vmatprep.subr.bf16.mxu0 0
        %284 = vmatpush1.bf16.msra.mxu0 0
        %285 = vmatprep.subr.bf16.mxu0 0
        %286 = vmatpush1.bf16.msra.mxu0 0
        %287 = vmatprep.subr.bf16.mxu0 0
        %288 = vmatpush1.bf16.msra.mxu0 0
        %289 = vmatprep.subr.bf16.mxu0 0
        %290 = vmatpush1.bf16.msra.mxu0 0
        %291 = vmatprep.subr.bf16.mxu0 0
        %292 = vmatpush1.bf16.msra.mxu0 0
        %293 = vmatprep.mubr.bf16.mxu0 0
        %294 = vmatmul.mubr.bf16.gmra.mrb[0].mxu0 %v196
        %v295 = vpop.f32.mrb[0].mxu0
        %v296 = vadd.f32 0.0, %v295
        %v297 = vpop.f32.mrb[0].mxu0
        %v298 = vpop.f32.mrb[0].mxu0
        %v299 = vpop.f32.mrb[0].mxu0
        %300 = vdwg.mxu0
        %s301 = sld [smem:[#allocation3 + %s27]]
        %p302 = scmp.gt.s32.totalorder %s301, 0
        // Predicated region
        $region37: #{tpu_custom_call.1} parent=31 // pred_check
          %p303 = pneg %p302
        $region38: #{tpu_custom_call.1} parent=31 // pred_check_branch
          %305 = sbr.rel (%p303) target = $region40
        $region39: #{tpu_custom_call.1} parent=31 // pred_region
          %v306 = vmul.f32 %v296, %v296
          %v307 = vsub.f32 1.0, %v306
          %v308 = vmax.f32 %v307, 0.0
          %v309 = vrsqrt.pop %v308
          %v310 = vmul.f32 %v308, %v309
          %vm311 = vcmp.eq.f32.partialorder %v308, inf
          %v312 = vsel %vm311, %v308, %v310
          %vm313 = vcmp.eq.f32.partialorder %v308, 0.0
          %v314 = vand.u32 %v308, 2147483648
          %v315 = vsel %vm313, %v314, %v312
          %v316 = vmul.f32 %v296, 0.87758255
          %v317 = vmul.f32 %v315, 0.47942555
          %v318 = vsub.f32 %v316, %v317
          %vm319 = vcmp.gt.f32.partialorder %v296, -0.87758255
          %v320 = vsub.f32 %v296, 0.23971277
          %v321 = vsel %vm319, %v318, %v320
          %v322 = vlaneseq
          %v323 = vand.u32 %v322, 127
          %s324 = smul.u32 %s27, 128
          %v325 = vstv %s324
          %v326 = vadd.s32 %v323, %v325
          %v327 = vld [vmem:[%s2] sm:$0xf]
          %328 = vset.pattern.permute.xlu0 0
          %329 = vperm.xlu0 %328, %v327
          %v330 = vpop.permute.xlu0 %329
          %vm331 = vcmp.eq.s32.totalorder %v326, %v330
          %v332 = vsel %vm331, %v321, %v296
          %v333 = vmul.f32 %v332, 30.0
          %334 = vst [vmem:[%s194] sm:$0xf] %v333
        $region40: #{tpu_custom_call.1} parent=31 // pred_fallthru
          _
        %p335 = scmp.le.s32.totalorder %s301, 0
        // Predicated region
        $region41: #{tpu_custom_call.1} parent=31 // pred_check
          %p336 = pneg %p335
        $region42: #{tpu_custom_call.1} parent=31 // pred_check_branch
          %338 = sbr.rel (%p336) target = $region44
        $region43: #{tpu_custom_call.1} parent=31 // pred_region
          %v339 = vmul.f32 %v296, 30.0
          %340 = vst [vmem:[%s194] sm:$0xf] %v339
        $region44: #{tpu_custom_call.1} parent=31 // pred_fallthru
          _
        %s341 = sand.u32 %s103, 1
        %s342 = scalar_lea.sflag [#allocation6], %s341
        %s343 = sand.u32 %s103, 1
        %s344 = smul.addr %s343, 4
        %s345 = scalar_lea.vmem [#allocation7], %s344
        // Predicated region
        $region45: #{tpu_custom_call.1} parent=31 // pred_check
          %p346 = pneg %p113
        $region46: #{tpu_custom_call.1} parent=31 // pred_check_branch
          %348 = sbr.rel (%p346) target = $region48
        $region47: #{tpu_custom_call.1} parent=31 // pred_region
          %s350 = ssub.s32 64, 64
          %351 = vsyncadd %s342, %s350
          %s352 = smul.addr %s27, 64
          %s353 = scalar_lea.hbm %s4, %s352
          %s355 = sshll.u32 %s345, 4
          %s356 = int_to_ptr.vmem [resolvable:$true] %s355
          %358 = dma.vmem_to_hbm [thread:$0]  %s356, 64, %s353, %s342
        $region48: #{tpu_custom_call.1} parent=31 // pred_fallthru
          _
      $region32: #{tpu_custom_call.1} parent=5 // pred_fallthru
        _
      %p359 = scmp.le.s32.totalorder 2, %s22
      // Predicated region
      $region49: #{tpu_custom_call.1} parent=5 // pred_check
        %p360 = pneg %p359
      $region50: #{tpu_custom_call.1} parent=5 // pred_check_branch
        %362 = sbr.rel (%p360) target = $region52
      $region51: #{tpu_custom_call.1} parent=5 // pred_region
        %s363 = ssub.s32 %s22, 2
        // Predicated region
        $region53: #{tpu_custom_call.1} parent=51 // pred_check
          %p364 = pneg %p119
        $region54: #{tpu_custom_call.1} parent=51 // pred_check_branch
          %366 = sbr.rel (%p364) target = $region56
        $region55: #{tpu_custom_call.1} parent=51 // pred_region
          %s367 = sand.u32 %s104, 1
          %s368 = scalar_lea.sflag [#allocation6], %s367
          %s369 = sand.u32 %s104, 1
          %s370 = smul.addr %s369, 4
          %s371 = scalar_lea.vmem [#allocation7], %s370
          %372 = dma.done %s368, 64
        $region56: #{tpu_custom_call.1} parent=51 // pred_fallthru
          _
      $region52: #{tpu_custom_call.1} parent=5 // pred_fallthru
        _
    $region6: #{tpu_custom_call.1} parent=1 // loop_footer
      %s26 = sadd.s32 1, %s22
    $region7: #{tpu_custom_call.1} parent=1 // loop_footer_branch
      %21 = sbr.rel target = $region3
    $region8: #{tpu_custom_call.1} parent=1 // loop_exit
      _
    %373 = vsyncpa [#allocation5], 1
    %s374 = scalar_lea.sflag [#allocation5], 1
    %375 = vsyncpa %s374, 1
    %376 = vsyncpa [#allocation6], 1
    %s377 = scalar_lea.sflag [#allocation6], 1
    %378 = vsyncpa %s377, 1

</llo_original>
